<compile_context>
chip_gen: v7x
topology: tpu7x:2x2x1
jax: 0.10.0
libtpu: 0.0.40
codegen_flags: <defaults>
</compile_context>

<pallas_src>
import jax
import jax.numpy as jnp
from jax.experimental import pallas as pl
from jax.experimental.pallas import tpu as pltpu


def _activation_fn(name):
    if name == "relu":
        return lambda x: jnp.maximum(x, 0.0)
    if name == "tanh":
        return jnp.tanh
    if name == "swish":
        return lambda x: x * jax.nn.sigmoid(x)
    raise ValueError(f"activation {name} not supported")


def _round_up(x, m):
    return ((x + m - 1) // m) * m


def _cdiv(a, b):
    return (a + b - 1) // b


def _num_tensorcores_per_chip():
    """v7x has 2 TensorCores per chip (megacore grid sharding); v5e/v6e have 1."""
    try:
        kind = jax.devices()[0].device_kind.lower()
    except Exception:
        return 1
    return 2 if "v7" in kind else 1


def _choose_tm(B, num_tc, cap=1024):
    """Batch tile.

    Single-TC (v5e/v6e): the grid is a serial loop, so one big step is strictly
    best -> tm = min(B, cap).  (tm == B is legal even when B isn't a multiple
    of 8 because the block dim equals the full array dim.)

    v7x (2 TCs): aim for an even number of grid steps so both cores get equal
    work; tiles stay multiples of 8 rows and the tail block is partial.
    """
    if num_tc <= 1 or B <= 8:
        return min(B, cap)
    steps = max(2, 2 * _cdiv(_cdiv(B, cap), 2))   # even, >= 2
    tm = _round_up(_cdiv(B, steps), 8)
    return max(8, min(tm, cap))


def _const_block_spec(shape):
    """BlockSpec for a grid-invariant (constant index_map) operand.

    Single-buffered: the block is fetched once, double-buffering it would only
    double its VMEM residency.  Falls back to the default if this JAX version's
    BlockSpec has no pipeline_mode kwarg.
    """
    index_map = lambda i: (0,) * len(shape)
    try:
        return pl.BlockSpec(shape, index_map, pipeline_mode=pl.Buffered(1))
    except TypeError:
        return pl.BlockSpec(shape, index_map)


def _make_mlp_kernel(n_layers, activation):
    act = _activation_fn(activation)

    def kernel(x_ref, *refs):
        # refs = (w0, b0, w1, b1, ..., w_{L-1}, b_{L-1}, o_ref)
        o_ref = refs[-1]
        param_refs = refs[:-1]
        h = x_ref[...].astype(jnp.float32)
        for li in range(n_layers):
            w = param_refs[2 * li][...]                          # [in, out]
            b = param_refs[2 * li + 1][...].astype(jnp.float32)  # [1, out]
            # MXU matmul in the weight dtype (bf16 or f32), f32 accumulation.
            h = jnp.dot(h.astype(w.dtype), w,
                        preferred_element_type=jnp.float32) + b
            if li < n_layers - 1:
                h = act(h)
        o_ref[...] = h.astype(o_ref.dtype)

    return kernel


def prepare_mlp_params(params, *, param_dtype=jnp.float32):
    """One-time prep: cast to param_dtype and reshape biases to (1, out).
    Do this once outside the hot path so mlp_forward emits only the pallas_call."""
    return [(w.astype(param_dtype), b.astype(param_dtype).reshape(1, -1))
            for (w, b) in params]


def mlp_forward(x, prepared_params, *, activation):
    """x: [B, idim]. prepared_params: output of prepare_mlp_params
    (W stored [in, out], i.e. transposed vs PyTorch). Returns [B, out_dim]."""
    B, idim = x.shape
    n_layers = len(prepared_params)
    out_dim = prepared_params[-1][0].shape[1]          # 2

    num_tc = _num_tensorcores_per_chip()
    tm = _choose_tm(B, num_tc)
    grid_m = _cdiv(B, tm)

    kernel = _make_mlp_kernel(n_layers, activation)

    # x tile: (tm, idim); last dim == full array dim so any idim is legal.
    in_specs = [pl.BlockSpec((tm, idim), lambda i: (i, 0))]
    flat_params = []
    for (w, b2d) in prepared_params:
        in_d, out_d = w.shape
        in_specs.append(_const_block_spec((in_d, out_d)))
        in_specs.append(_const_block_spec((1, out_d)))
        flat_params.append(w)
        flat_params.append(b2d)
    # Narrow (tm, 2) output block: legal because the last block dim equals the
    # full array dim, and a (tm, 2) f32 row-major block is one contiguous DMA.
    out_specs = pl.BlockSpec((tm, out_dim), lambda i: (i, 0))
    out_dtype = x.dtype

    # --- honest VMEM budget (v7x has only 64 MiB physical) ------------------
    x_bytes = x.dtype.itemsize
    param_bytes = sum(w.size * w.dtype.itemsize + b.size * b.dtype.itemsize
                      for (w, b) in prepared_params)
    max_dim = max([idim] + [w.shape[1] for (w, _) in prepared_params])
    est = (2 * tm * idim * x_bytes                     # double-buffered x tile
           + 2 * tm * out_dim * jnp.dtype(out_dtype).itemsize
           + param_bytes                               # single-buffered weights
           + 4 * tm * max_dim * 4)                     # live f32 intermediates
    vmem_limit = int(min(max(2 * est, 8 * 2**20), 48 * 2**20))

    # --- advisory cost estimate ---------------------------------------------
    flops = 2 * B * sum(w.shape[0] * w.shape[1] for (w, _) in prepared_params)
    trans = 0 if activation == "relu" else B * sum(
        w.shape[1] for (w, _) in prepared_params[:-1])
    bytes_acc = (B * idim * x_bytes
                 + B * out_dim * jnp.dtype(out_dtype).itemsize
                 + param_bytes)
    cost = pl.CostEstimate(flops=int(flops), transcendentals=int(trans),
                           bytes_accessed=int(bytes_acc))

    return pl.pallas_call(
        kernel,
        out_shape=jax.ShapeDtypeStruct((B, out_dim), out_dtype),
        grid_spec=pltpu.PrefetchScalarGridSpec(
            num_scalar_prefetch=0,
            grid=(grid_m,),
            in_specs=in_specs,
            out_specs=out_specs,
        ),
        compiler_params=pltpu.CompilerParams(
            dimension_semantics=("parallel",),
            vmem_limit_bytes=vmem_limit,
        ),
        cost_estimate=cost,
    )(x, *flat_params)


def init_mlp_params(key, *, idim, hdim, n_layers):
    """Mirror nn.Linear default init (uniform +-1/sqrt(fan_in)); W stored [in, out]."""
    dims = [idim] + [hdim] * (n_layers - 1) + [2]
    params = []
    for li in range(n_layers):
        fan_in, fan_out = dims[li], dims[li + 1]
        key, kw, kb = jax.random.split(key, 3)
        bound = 1.0 / jnp.sqrt(fan_in)
        w = jax.random.uniform(kw, (fan_in, fan_out), jnp.float32, -bound, bound)
        b = jax.random.uniform(kb, (fan_out,), jnp.float32, -bound, bound)
        params.append((w, b))
    return params


def mlp_reference(x, params, *, activation):
    act = _activation_fn(activation)
    h = x
    for li, (w, b) in enumerate(params):
        h = h @ w + b
        if li < len(params) - 1:
            h = act(h)
    return h


if __name__ == "__main__":
    idim, hdim, n_layers = 16, 32, 3
    activation = "swish"
    B = 20  # non-multiple-of-8 on purpose: exercises the partial-block path

    key = jax.random.PRNGKey(0)
    key, kx = jax.random.split(key)
    x = jax.random.normal(kx, (B, idim), jnp.float32)
    params = init_mlp_params(key, idim=idim, hdim=hdim, n_layers=n_layers)

    ref = mlp_reference(x, params, activation=activation)

    # f32 weights: strict check.
    prep_f32 = prepare_mlp_params(params, param_dtype=jnp.float32)
    out = mlp_forward(x, prep_f32, activation=activation)
    out = jax.block_until_ready(out)
    assert out.shape == (B, 2), out.shape
    assert jnp.allclose(out, ref, atol=1e-5, rtol=1e-5), (
        float(jnp.max(jnp.abs(out - ref)))
    )

    # bf16 weights (v6e/v7x fast path; activations quantized per layer,
    # f32 accumulation): loose check.
    prep_bf16 = prepare_mlp_params(params, param_dtype=jnp.bfloat16)
    out_bf16 = mlp_forward(x, prep_bf16, activation=activation)
    out_bf16 = jax.block_until_ready(out_bf16)
    assert out_bf16.shape == (B, 2), out_bf16.shape
    assert jnp.allclose(out_bf16, ref, atol=1e-1, rtol=1e-1), (
        float(jnp.max(jnp.abs(out_bf16 - ref)))
    )

    print("KERNEL_OK")
</pallas_src>

<mosaic_0001>
module attributes {stable_mosaic.version = 11 : i64} {
  func.func @kernel(%arg0: i32, %arg1: memref<20x16xf32, #tpu.memory_space<vmem>>, %arg2: memref<16x32xf32, #tpu.memory_space<vmem>>, %arg3: memref<1x32xf32, #tpu.memory_space<vmem>>, %arg4: memref<32x32xf32, #tpu.memory_space<vmem>>, %arg5: memref<1x32xf32, #tpu.memory_space<vmem>>, %arg6: memref<32x2xf32, #tpu.memory_space<vmem>>, %arg7: memref<1x2xf32, #tpu.memory_space<vmem>>, %arg8: memref<20x2xf32, #tpu.memory_space<vmem>>) attributes {dimension_semantics = [#tpu.dimension_semantics<parallel>], iteration_bounds = array<i64: 1>, scalar_prefetch = 0 : i64, scratch_operands = 0 : i64, tpu.core_type = #tpu.core_type<tc>, window_params = [{transform_indices = @transform_0, window_bounds = array<i64: 20, 16>}, {pipeline_mode = #tpu.pipeline_mode<synchronous>, transform_indices = @transform_1, window_bounds = array<i64: 16, 32>}, {pipeline_mode = #tpu.pipeline_mode<synchronous>, transform_indices = @transform_2, window_bounds = array<i64: 1, 32>}, {pipeline_mode = #tpu.pipeline_mode<synchronous>, transform_indices = @transform_3, window_bounds = array<i64: 32, 32>}, {pipeline_mode = #tpu.pipeline_mode<synchronous>, transform_indices = @transform_4, window_bounds = array<i64: 1, 32>}, {pipeline_mode = #tpu.pipeline_mode<synchronous>, transform_indices = @transform_5, window_bounds = array<i64: 32, 2>}, {pipeline_mode = #tpu.pipeline_mode<synchronous>, transform_indices = @transform_6, window_bounds = array<i64: 1, 2>}, {transform_indices = @transform_7, window_bounds = array<i64: 20, 2>}]} {
    %c0 = arith.constant 0 : index
    %c0_0 = arith.constant 0 : index
    %0 = vector.load %arg1[%c0, %c0_0] : memref<20x16xf32, #tpu.memory_space<vmem>>, vector<20x16xf32>
    %c0_1 = arith.constant 0 : index
    %c0_2 = arith.constant 0 : index
    %1 = vector.load %arg2[%c0_1, %c0_2] : memref<16x32xf32, #tpu.memory_space<vmem>>, vector<16x32xf32>
    %c0_3 = arith.constant 0 : index
    %c0_4 = arith.constant 0 : index
    %2 = vector.load %arg3[%c0_3, %c0_4] : memref<1x32xf32, #tpu.memory_space<vmem>>, vector<1x32xf32>
    %cst = arith.constant dense<0.000000e+00> : vector<20x32xf32>
    %3 = tpu.matmul %0, %1, %cst {dimension_numbers = #tpu.dot_dimension_numbers<[1], [0], [0], [1], [0, 0, 1, 1], [], []>} : vector<20x16xf32>, vector<16x32xf32>, vector<20x32xf32> -> vector<20x32xf32>
    %4 = vector.broadcast %2 : vector<1x32xf32> to vector<20x32xf32>
    %5 = arith.addf %3, %4 : vector<20x32xf32>
    %6 = arith.negf %5 : vector<20x32xf32>
    %7 = math.exp %6 : vector<20x32xf32>
    %cst_5 = arith.constant 1.000000e+00 : f32
    %8 = vector.broadcast %cst_5 : f32 to vector<20x32xf32>
    %9 = arith.addf %8, %7 : vector<20x32xf32>
    %10 = arith.divf %8, %9 : vector<20x32xf32>
    %11 = arith.mulf %5, %10 : vector<20x32xf32>
    %c0_6 = arith.constant 0 : index
    %c0_7 = arith.constant 0 : index
    %12 = vector.load %arg4[%c0_6, %c0_7] : memref<32x32xf32, #tpu.memory_space<vmem>>, vector<32x32xf32>
    %c0_8 = arith.constant 0 : index
    %c0_9 = arith.constant 0 : index
    %13 = vector.load %arg5[%c0_8, %c0_9] : memref<1x32xf32, #tpu.memory_space<vmem>>, vector<1x32xf32>
    %cst_10 = arith.constant dense<0.000000e+00> : vector<20x32xf32>
    %14 = tpu.matmul %11, %12, %cst_10 {dimension_numbers = #tpu.dot_dimension_numbers<[1], [0], [0], [1], [0, 0, 1, 1], [], []>} : vector<20x32xf32>, vector<32x32xf32>, vector<20x32xf32> -> vector<20x32xf32>
    %15 = vector.broadcast %13 : vector<1x32xf32> to vector<20x32xf32>
    %16 = arith.addf %14, %15 : vector<20x32xf32>
    %17 = arith.negf %16 : vector<20x32xf32>
    %18 = math.exp %17 : vector<20x32xf32>
    %cst_11 = arith.constant 1.000000e+00 : f32
    %19 = vector.broadcast %cst_11 : f32 to vector<20x32xf32>
    %20 = arith.addf %19, %18 : vector<20x32xf32>
    %21 = arith.divf %19, %20 : vector<20x32xf32>
    %22 = arith.mulf %16, %21 : vector<20x32xf32>
    %c0_12 = arith.constant 0 : index
    %c0_13 = arith.constant 0 : index
    %23 = vector.load %arg6[%c0_12, %c0_13] : memref<32x2xf32, #tpu.memory_space<vmem>>, vector<32x2xf32>
    %c0_14 = arith.constant 0 : index
    %c0_15 = arith.constant 0 : index
    %24 = vector.load %arg7[%c0_14, %c0_15] : memref<1x2xf32, #tpu.memory_space<vmem>>, vector<1x2xf32>
    %cst_16 = arith.constant dense<0.000000e+00> : vector<20x2xf32>
    %25 = tpu.matmul %22, %23, %cst_16 {dimension_numbers = #tpu.dot_dimension_numbers<[1], [0], [0], [1], [0, 0, 1, 1], [], []>} : vector<20x32xf32>, vector<32x2xf32>, vector<20x2xf32> -> vector<20x2xf32>
    %26 = vector.broadcast %24 : vector<1x2xf32> to vector<20x2xf32>
    %27 = arith.addf %25, %26 : vector<20x2xf32>
    %c0_17 = arith.constant 0 : index
    %c0_18 = arith.constant 0 : index
    %28 = vector.load %arg8[%c0_17, %c0_18] : memref<20x2xf32, #tpu.memory_space<vmem>>, vector<20x2xf32>
    tpu.vector_store %arg8[%c0_17, %c0_18], %27 {strides = array<i32>} : memref<20x2xf32, #tpu.memory_space<vmem>>, vector<20x2xf32>,
    return
  }
  func.func @transform_0(%arg0: i32) -> (i32, i32) {
    %c0_i32 = arith.constant 0 : i32
    %c0_i32_0 = arith.constant 0 : i32
    return %arg0, %c0_i32 : i32, i32
  }
  func.func @transform_1(%arg0: i32) -> (i32, i32) {
    %c0_i32 = arith.constant 0 : i32
    %c0_i32_0 = arith.constant 0 : i32
    %c0_i32_1 = arith.constant 0 : i32
    return %c0_i32, %c0_i32_0 : i32, i32
  }
  func.func @transform_2(%arg0: i32) -> (i32, i32) {
    %c0_i32 = arith.constant 0 : i32
    %c0_i32_0 = arith.constant 0 : i32
    %c0_i32_1 = arith.constant 0 : i32
    return %c0_i32, %c0_i32_0 : i32, i32
  }
  func.func @transform_3(%arg0: i32) -> (i32, i32) {
    %c0_i32 = arith.constant 0 : i32
    %c0_i32_0 = arith.constant 0 : i32
    %c0_i32_1 = arith.constant 0 : i32
    return %c0_i32, %c0_i32_0 : i32, i32
  }
  func.func @transform_4(%arg0: i32) -> (i32, i32) {
    %c0_i32 = arith.constant 0 : i32
    %c0_i32_0 = arith.constant 0 : i32
    %c0_i32_1 = arith.constant 0 : i32
    return %c0_i32, %c0_i32_0 : i32, i32
  }
  func.func @transform_5(%arg0: i32) -> (i32, i32) {
    %c0_i32 = arith.constant 0 : i32
    %c0_i32_0 = arith.constant 0 : i32
    %c0_i32_1 = arith.constant 0 : i32
    return %c0_i32, %c0_i32_0 : i32, i32
  }
  func.func @transform_6(%arg0: i32) -> (i32, i32) {
    %c0_i32 = arith.constant 0 : i32
    %c0_i32_0 = arith.constant 0 : i32
    %c0_i32_1 = arith.constant 0 : i32
    return %c0_i32, %c0_i32_0 : i32, i32
  }
  func.func @transform_7(%arg0: i32) -> (i32, i32) {
    %c0_i32 = arith.constant 0 : i32
    %c0_i32_0 = arith.constant 0 : i32
    return %arg0, %c0_i32 : i32, i32
  }
}

</mosaic_0001>

<llo_original>
// kernel: tpu_custom_call.1
$region0: #{tpu_custom_call.1}
  #allocation0 [shape = 'u32[]', space=smem, size = 0x4, offset = 0x4, fixed_abs, tag = 'smem constant byte address 0x4 - core index']
  #allocation1 [shape = 'u32[144,128]{1,0:T(1,128)}', space=vmem, size = 0x12000, scoped, tag = 'internal scratch']
  %s0 = inlined_call_operand.vmem [shape: f32[20,16], index: 0, kind: input, shape index: {}]
  %s1 = inlined_call_operand.vmem [shape: f32[16,32], index: 1, kind: input, shape index: {}]
  %s2 = inlined_call_operand.vmem [shape: f32[1,32], index: 2, kind: input, shape index: {}]
  %s3 = inlined_call_operand.vmem [shape: f32[32,32], index: 3, kind: input, shape index: {}]
  %s4 = inlined_call_operand.vmem [shape: f32[1,32], index: 4, kind: input, shape index: {}]
  %s5 = inlined_call_operand.vmem [shape: f32[32,2], index: 5, kind: input, shape index: {}]
  %s6 = inlined_call_operand.vmem [shape: f32[1,2], index: 6, kind: input, shape index: {}]
  %s7 = inlined_call_operand.vmem [shape: f32[20,2], index: 7, kind: output, shape index: {}]
  %s8 = sld [smem:[#allocation0]]
  $region38: #{tpu_custom_call.1} parent=0
    _
  %s10 = ssub.s32 1, %s8
  %s11 = scalar_select 0, %s10, %s8
  // Predicated region
  $region2: #{tpu_custom_call.1} parent=0 // pred_check
    _
  $region3: #{tpu_custom_call.1} parent=0 // pred_check_branch
    %13 = sbr.rel (0) target = $region5
  $region4: #{tpu_custom_call.1} parent=0 // pred_region
    _
  $region5: #{tpu_custom_call.1} parent=0 // pred_fallthru
    _
  // Predicated region
  $region6: #{tpu_custom_call.1} parent=0 // pred_check
    _
  $region7: #{tpu_custom_call.1} parent=0 // pred_check_branch
    %15 = sbr.rel (0) target = $region9
  $region8: #{tpu_custom_call.1} parent=0 // pred_region
    _
  $region9: #{tpu_custom_call.1} parent=0 // pred_fallthru
    _
  // Predicated region
  $region10: #{tpu_custom_call.1} parent=0 // pred_check
    _
  $region11: #{tpu_custom_call.1} parent=0 // pred_check_branch
    %17 = sbr.rel (0) target = $region13
  $region12: #{tpu_custom_call.1} parent=0 // pred_region
    _
  $region13: #{tpu_custom_call.1} parent=0 // pred_fallthru
    _
  // Predicated region
  $region14: #{tpu_custom_call.1} parent=0 // pred_check
    _
  $region15: #{tpu_custom_call.1} parent=0 // pred_check_branch
    %19 = sbr.rel (0) target = $region17
  $region16: #{tpu_custom_call.1} parent=0 // pred_region
    _
  $region17: #{tpu_custom_call.1} parent=0 // pred_fallthru
    _
  // Predicated region
  $region18: #{tpu_custom_call.1} parent=0 // pred_check
    _
  $region19: #{tpu_custom_call.1} parent=0 // pred_check_branch
    %21 = sbr.rel (0) target = $region21
  $region20: #{tpu_custom_call.1} parent=0 // pred_region
    _
  $region21: #{tpu_custom_call.1} parent=0 // pred_fallthru
    _
  // Predicated region
  $region22: #{tpu_custom_call.1} parent=0 // pred_check
    _
  $region23: #{tpu_custom_call.1} parent=0 // pred_check_branch
    %23 = sbr.rel (0) target = $region25
  $region24: #{tpu_custom_call.1} parent=0 // pred_region
    _
  $region25: #{tpu_custom_call.1} parent=0 // pred_fallthru
    _
  // Predicated region
  $region26: #{tpu_custom_call.1} parent=0 // pred_check
    _
  $region27: #{tpu_custom_call.1} parent=0 // pred_check_branch
    %25 = sbr.rel (0) target = $region29
  $region28: #{tpu_custom_call.1} parent=0 // pred_region
    _
  $region29: #{tpu_custom_call.1} parent=0 // pred_fallthru
    _
  %v26 = vld [vmem:[%s0] sm:$0xff]
  %v27 = vld [vmem:[%s0 + $0x8] sm:$0xff]
  %v28 = vld [vmem:[%s0 + $0x10] sm:$0xf]
  %v29 = vld [vmem:[%s1] sm:$0xff]
  %v30 = vld [vmem:[%s1 + $0x8] sm:$0xff]
  %v31 = vld [vmem:[%s2] sm:$0x1]
  %v33 = vlaneseq
  %v34 = vshrl.u32 %v33, 7
  %v35 = vsub.s32 0, %v34
  %v36 = vrot.slane %v31, %v35
  %vm38 = vcmask 130048
  %v40 = vsel %vm38, %v26, 0
  %v43 = vsel %vm38, %v27, 0
  %v46 = vsel %vm38, %v28, 0
  %48 = vmatprep.subr.mxu0 0.0
  %49 = vmatpush1.msra.mxu0 %v29
  %50 = vmatprep.subr.mxu0 0.0
  %51 = vmatpush1.msra.mxu0 %v30
  %52 = vmatprep.subr.mxu0 0.0
  %53 = vmatpush1.msra.mxu0 0.0
  %54 = vmatprep.subr.mxu0 0.0
  %55 = vmatpush1.msra.mxu0 0.0
  %56 = vmatprep.subr.mxu0 0.0
  %57 = vmatpush1.msra.mxu0 0.0
  %58 = vmatprep.subr.mxu0 0.0
  %59 = vmatpush1.msra.mxu0 0.0
  %60 = vmatprep.subr.mxu0 0.0
  %61 = vmatpush1.msra.mxu0 0.0
  %62 = vmatprep.subr.mxu0 0.0
  %63 = vmatpush1.msra.mxu0 0.0
  %64 = vmatprep.subr.mxu0 0.0
  %65 = vmatpush1.msra.mxu0 0.0
  %66 = vmatprep.subr.mxu0 0.0
  %67 = vmatpush1.msra.mxu0 0.0
  %68 = vmatprep.subr.mxu0 0.0
  %69 = vmatpush1.msra.mxu0 0.0
  %70 = vmatprep.subr.mxu0 0.0
  %71 = vmatpush1.msra.mxu0 0.0
  %72 = vmatprep.subr.mxu0 0.0
  %73 = vmatpush1.msra.mxu0 0.0
  %74 = vmatprep.subr.mxu0 0.0
  %75 = vmatpush1.msra.mxu0 0.0
  %76 = vmatprep.subr.mxu0 0.0
  %77 = vmatpush1.msra.mxu0 0.0
  %78 = vmatprep.subr.mxu0 0.0
  %79 = vmatpush1.msra.mxu0 0.0
  %80 = vmatprep.subr.mxu0 0.0
  %81 = vmatpush1.msra.mxu0 0.0
  %82 = vmatprep.subr.mxu0 0.0
  %83 = vmatpush1.msra.mxu0 0.0
  %84 = vmatprep.subr.mxu0 0.0
  %85 = vmatpush1.msra.mxu0 0.0
  %86 = vmatprep.subr.mxu0 0.0
  %87 = vmatpush1.msra.mxu0 0.0
  %88 = vmatprep.subr.mxu0 0.0
  %89 = vmatpush1.msra.mxu0 0.0
  %90 = vmatprep.subr.mxu0 0.0
  %91 = vmatpush1.msra.mxu0 0.0
  %92 = vmatprep.subr.mxu0 0.0
  %93 = vmatpush1.msra.mxu0 0.0
  %94 = vmatprep.subr.mxu0 0.0
  %95 = vmatpush1.msra.mxu0 0.0
  %96 = vmatprep.subr.mxu0 0.0
  %97 = vmatpush1.msra.mxu0 0.0
  %98 = vmatprep.subr.mxu0 0.0
  %99 = vmatpush1.msra.mxu0 0.0
  %100 = vmatprep.subr.mxu0 0.0
  %101 = vmatpush1.msra.mxu0 0.0
  %102 = vmatprep.subr.mxu0 0.0
  %103 = vmatpush1.msra.mxu0 0.0
  %104 = vmatprep.subr.mxu0 0.0
  %105 = vmatpush1.msra.mxu0 0.0
  %106 = vmatprep.subr.mxu0 0.0
  %107 = vmatpush1.msra.mxu0 0.0
  %108 = vmatprep.subr.mxu0 0.0
  %109 = vmatpush1.msra.mxu0 0.0
  %110 = vmatprep.subr.mxu0 0.0
  %111 = vmatpush1.msra.mxu0 0.0
  %112 = vmatprep.mubr.f32.mxu0 0.0
  %113 = vmatmul.mubr.f32.gmra.mrb[0].mxu0 %v40
  %v114 = vpop.f32.mrb[0].mxu0
  %v115 = vadd.f32 %v36, %v114
  %v116 = vpop.f32.mrb[0].mxu0
  %117 = vmatprep.mubr.f32.mxu0 0.0
  %118 = vmatmul.mubr.f32.gmra.mrb[0].mxu0 %v43
  %v119 = vpop.f32.mrb[0].mxu0
  %v120 = vadd.f32 %v36, %v119
  %v121 = vpop.f32.mrb[0].mxu0
  %122 = vmatprep.mubr.f32.mxu0 0.0
  %123 = vmatmul.mubr.f32.gmra.mrb[0].mxu0 %v46
  %v124 = vpop.f32.mrb[0].mxu0
  %v125 = vadd.f32 %v36, %v124
  %v126 = vpop.f32.mrb[0].mxu0
  %127 = vdwg.mxu0
  %v128 = vxor.u32 %v115, 2147483648
  %v129 = vxor.u32 %v120, 2147483648
  %v130 = vxor.u32 %v125, 2147483648
  %v131 = vmul.f32 %v128, 1.442695
  %v132 = vpow.pop %v131
  %v133 = vmul.f32 %v129, 1.442695
  %v134 = vpow.pop %v133
  %v135 = vmul.f32 %v130, 1.442695
  %v136 = vpow.pop %v135
  %v137 = vadd.f32 %v132, 1.0
  %v138 = vadd.f32 %v134, 1.0
  %v139 = vadd.f32 %v136, 1.0
  %v140 = vrcp.pop %v137
  %v141 = vmul.f32 1.0, %v140
  %v142 = vrcp.pop %v138
  %v143 = vmul.f32 1.0, %v142
  %v144 = vrcp.pop %v139
  %v145 = vmul.f32 1.0, %v144
  %v146 = vmul.f32 %v115, %v141
  %v147 = vmul.f32 %v120, %v143
  %v148 = vmul.f32 %v125, %v145
  %v149 = vld [vmem:[%s3] sm:$0xff]
  %v150 = vld [vmem:[%s3 + $0x8] sm:$0xff]
  %v151 = vld [vmem:[%s3 + $0x10] sm:$0xff]
  %v152 = vld [vmem:[%s3 + $0x18] sm:$0xff]
  %v153 = vld [vmem:[%s4] sm:$0x1]
  %v155 = vlaneseq
  %v156 = vshrl.u32 %v155, 7
  %v157 = vsub.s32 0, %v156
  %v158 = vrot.slane %v153, %v157
  %vm160 = vcmask 261120
  %v162 = vsel %vm160, %v146, 0
  %v165 = vsel %vm160, %v147, 0
  %v168 = vsel %vm160, %v148, 0
  %170 = vmatprep.subr.mxu0 0.0
  %171 = vmatpush1.msra.mxu0 %v149
  %172 = vmatprep.subr.mxu0 0.0
  %173 = vmatpush1.msra.mxu0 %v150
  %174 = vmatprep.subr.mxu0 0.0
  %175 = vmatpush1.msra.mxu0 %v151
  %176 = vmatprep.subr.mxu0 0.0
  %177 = vmatpush1.msra.mxu0 %v152
  %178 = vmatprep.subr.mxu0 0.0
  %179 = vmatpush1.msra.mxu0 0.0
  %180 = vmatprep.subr.mxu0 0.0
  %181 = vmatpush1.msra.mxu0 0.0
  %182 = vmatprep.subr.mxu0 0.0
  %183 = vmatpush1.msra.mxu0 0.0
  %184 = vmatprep.subr.mxu0 0.0
  %185 = vmatpush1.msra.mxu0 0.0
  %186 = vmatprep.subr.mxu0 0.0
  %187 = vmatpush1.msra.mxu0 0.0
  %188 = vmatprep.subr.mxu0 0.0
  %189 = vmatpush1.msra.mxu0 0.0
  %190 = vmatprep.subr.mxu0 0.0
  %191 = vmatpush1.msra.mxu0 0.0
  %192 = vmatprep.subr.mxu0 0.0
  %193 = vmatpush1.msra.mxu0 0.0
  %194 = vmatprep.subr.mxu0 0.0
  %195 = vmatpush1.msra.mxu0 0.0
  %196 = vmatprep.subr.mxu0 0.0
  %197 = vmatpush1.msra.mxu0 0.0
  %198 = vmatprep.subr.mxu0 0.0
  %199 = vmatpush1.msra.mxu0 0.0
  %200 = vmatprep.subr.mxu0 0.0
  %201 = vmatpush1.msra.mxu0 0.0
  %202 = vmatprep.subr.mxu0 0.0
  %203 = vmatpush1.msra.mxu0 0.0
  %204 = vmatprep.subr.mxu0 0.0
  %205 = vmatpush1.msra.mxu0 0.0
  %206 = vmatprep.subr.mxu0 0.0
  %207 = vmatpush1.msra.mxu0 0.0
  %208 = vmatprep.subr.mxu0 0.0
  %209 = vmatpush1.msra.mxu0 0.0
  %210 = vmatprep.subr.mxu0 0.0
  %211 = vmatpush1.msra.mxu0 0.0
  %212 = vmatprep.subr.mxu0 0.0
  %213 = vmatpush1.msra.mxu0 0.0
  %214 = vmatprep.subr.mxu0 0.0
  %215 = vmatpush1.msra.mxu0 0.0
  %216 = vmatprep.subr.mxu0 0.0
  %217 = vmatpush1.msra.mxu0 0.0
  %218 = vmatprep.subr.mxu0 0.0
  %219 = vmatpush1.msra.mxu0 0.0
  %220 = vmatprep.subr.mxu0 0.0
  %221 = vmatpush1.msra.mxu0 0.0
  %222 = vmatprep.subr.mxu0 0.0
  %223 = vmatpush1.msra.mxu0 0.0
  %224 = vmatprep.subr.mxu0 0.0
  %225 = vmatpush1.msra.mxu0 0.0
  %226 = vmatprep.subr.mxu0 0.0
  %227 = vmatpush1.msra.mxu0 0.0
  %228 = vmatprep.subr.mxu0 0.0
  %229 = vmatpush1.msra.mxu0 0.0
  %230 = vmatprep.subr.mxu0 0.0
  %231 = vmatpush1.msra.mxu0 0.0
  %232 = vmatprep.subr.mxu0 0.0
  %233 = vmatpush1.msra.mxu0 0.0
  %234 = vmatprep.mubr.f32.mxu0 0.0
  %235 = vmatmul.mubr.f32.gmra.mrb[0].mxu0 %v162
  %v236 = vpop.f32.mrb[0].mxu0
  %v237 = vadd.f32 %v158, %v236
  %v238 = vpop.f32.mrb[0].mxu0
  %239 = vmatprep.mubr.f32.mxu0 0.0
  %240 = vmatmul.mubr.f32.gmra.mrb[0].mxu0 %v165
  %v241 = vpop.f32.mrb[0].mxu0
  %v242 = vadd.f32 %v158, %v241
  %v243 = vpop.f32.mrb[0].mxu0
  %244 = vmatprep.mubr.f32.mxu0 0.0
  %245 = vmatmul.mubr.f32.gmra.mrb[0].mxu0 %v168
  %v246 = vpop.f32.mrb[0].mxu0
  %v247 = vadd.f32 %v158, %v246
  %v248 = vpop.f32.mrb[0].mxu0
  %249 = vdwg.mxu0
  %v250 = vxor.u32 %v237, 2147483648
  %v251 = vxor.u32 %v242, 2147483648
  %v252 = vxor.u32 %v247, 2147483648
  %v253 = vmul.f32 %v250, 1.442695
  %v254 = vpow.pop %v253
  %v255 = vmul.f32 %v251, 1.442695
  %v256 = vpow.pop %v255
  %v257 = vmul.f32 %v252, 1.442695
  %v258 = vpow.pop %v257
  %v259 = vadd.f32 %v254, 1.0
  %v260 = vadd.f32 %v256, 1.0
  %v261 = vadd.f32 %v258, 1.0
  %v262 = vrcp.pop %v259
  %v263 = vmul.f32 1.0, %v262
  %v264 = vrcp.pop %v260
  %v265 = vmul.f32 1.0, %v264
  %v266 = vrcp.pop %v261
  %v267 = vmul.f32 1.0, %v266
  %v268 = vmul.f32 %v237, %v263
  %v269 = vmul.f32 %v242, %v265
  %v270 = vmul.f32 %v247, %v267
  %v271 = vld [vmem:[%s5] sm:$0xff]
  %v272 = vld [vmem:[%s5 + $0x8] sm:$0xff]
  %v273 = vld [vmem:[%s5 + $0x10] sm:$0xff]
  %v274 = vld [vmem:[%s5 + $0x18] sm:$0xff]
  %v275 = vld [vmem:[%s6] sm:$0x1]
  %v277 = vlaneseq
  %v278 = vshrl.u32 %v277, 7
  %v279 = vsub.s32 0, %v278
  %v280 = vrot.slane %v275, %v279
  %v283 = vsel %vm160, %v268, 0
  %v286 = vsel %vm160, %v269, 0
  %v289 = vsel %vm160, %v270, 0
  %291 = vmatprep.subr.mxu0 0.0
  %292 = vmatpush1.msra.mxu0 %v271
  %293 = vmatprep.subr.mxu0 0.0
  %294 = vmatpush1.msra.mxu0 %v272
  %295 = vmatprep.subr.mxu0 0.0
  %296 = vmatpush1.msra.mxu0 %v273
  %297 = vmatprep.subr.mxu0 0.0
  %298 = vmatpush1.msra.mxu0 %v274
  %299 = vmatprep.subr.mxu0 0.0
  %300 = vmatpush1.msra.mxu0 0.0
  %301 = vmatprep.subr.mxu0 0.0
  %302 = vmatpush1.msra.mxu0 0.0
  %303 = vmatprep.subr.mxu0 0.0
  %304 = vmatpush1.msra.mxu0 0.0
  %305 = vmatprep.subr.mxu0 0.0
  %306 = vmatpush1.msra.mxu0 0.0
  %307 = vmatprep.subr.mxu0 0.0
  %308 = vmatpush1.msra.mxu0 0.0
  %309 = vmatprep.subr.mxu0 0.0
  %310 = vmatpush1.msra.mxu0 0.0
  %311 = vmatprep.subr.mxu0 0.0
  %312 = vmatpush1.msra.mxu0 0.0
  %313 = vmatprep.subr.mxu0 0.0
  %314 = vmatpush1.msra.mxu0 0.0
  %315 = vmatprep.subr.mxu0 0.0
  %316 = vmatpush1.msra.mxu0 0.0
  %317 = vmatprep.subr.mxu0 0.0
  %318 = vmatpush1.msra.mxu0 0.0
  %319 = vmatprep.subr.mxu0 0.0
  %320 = vmatpush1.msra.mxu0 0.0
  %321 = vmatprep.subr.mxu0 0.0
  %322 = vmatpush1.msra.mxu0 0.0
  %323 = vmatprep.subr.mxu0 0.0
  %324 = vmatpush1.msra.mxu0 0.0
  %325 = vmatprep.subr.mxu0 0.0
  %326 = vmatpush1.msra.mxu0 0.0
  %327 = vmatprep.subr.mxu0 0.0
  %328 = vmatpush1.msra.mxu0 0.0
  %329 = vmatprep.subr.mxu0 0.0
  %330 = vmatpush1.msra.mxu0 0.0
  %331 = vmatprep.subr.mxu0 0.0
  %332 = vmatpush1.msra.mxu0 0.0
  %333 = vmatprep.subr.mxu0 0.0
  %334 = vmatpush1.msra.mxu0 0.0
  %335 = vmatprep.subr.mxu0 0.0
  %336 = vmatpush1.msra.mxu0 0.0
  %337 = vmatprep.subr.mxu0 0.0
  %338 = vmatpush1.msra.mxu0 0.0
  %339 = vmatprep.subr.mxu0 0.0
  %340 = vmatpush1.msra.mxu0 0.0
  %341 = vmatprep.subr.mxu0 0.0
  %342 = vmatpush1.msra.mxu0 0.0
  %343 = vmatprep.subr.mxu0 0.0
  %344 = vmatpush1.msra.mxu0 0.0
  %345 = vmatprep.subr.mxu0 0.0
  %346 = vmatpush1.msra.mxu0 0.0
  %347 = vmatprep.subr.mxu0 0.0
  %348 = vmatpush1.msra.mxu0 0.0
  %349 = vmatprep.subr.mxu0 0.0
  %350 = vmatpush1.msra.mxu0 0.0
  %351 = vmatprep.subr.mxu0 0.0
  %352 = vmatpush1.msra.mxu0 0.0
  %353 = vmatprep.subr.mxu0 0.0
  %354 = vmatpush1.msra.mxu0 0.0
  %355 = vmatprep.mubr.f32.mxu0 0.0
  %356 = vmatmul.mubr.f32.gmra.mrb[0].mxu0 %v283
  %v357 = vpop.f32.mrb[0].mxu0
  %v358 = vadd.f32 %v280, %v357
  %v359 = vpop.f32.mrb[0].mxu0
  %360 = vmatprep.mubr.f32.mxu0 0.0
  %361 = vmatmul.mubr.f32.gmra.mrb[0].mxu0 %v286
  %v362 = vpop.f32.mrb[0].mxu0
  %v363 = vadd.f32 %v280, %v362
  %v364 = vpop.f32.mrb[0].mxu0
  %365 = vmatprep.mubr.f32.mxu0 0.0
  %366 = vmatmul.mubr.f32.gmra.mrb[0].mxu0 %v289
  %v367 = vpop.f32.mrb[0].mxu0
  %v368 = vadd.f32 %v280, %v367
  %v369 = vpop.f32.mrb[0].mxu0
  %370 = vdwg.mxu0
  %vm371 = vcmask 15360
  %372 = vst.msk [vmem:[%s7] sm:$0xff] %vm371, %v358
  %373 = vst.msk [vmem:[%s7 + $0x8] sm:$0xff] %vm371, %v363
  %vm374 = vcmask 11264
  %375 = vst.msk [vmem:[%s7 + $0x10] sm:$0xf] %vm374, %v368
  // Predicated region
  $region30: #{tpu_custom_call.1} parent=0 // pred_check
    _
  $region31: #{tpu_custom_call.1} parent=0 // pred_check_branch
    %377 = sbr.rel (0) target = $region33
  $region32: #{tpu_custom_call.1} parent=0 // pred_region
    _
  $region33: #{tpu_custom_call.1} parent=0 // pred_fallthru
    _
  // Predicated region
  $region34: #{tpu_custom_call.1} parent=0 // pred_check
    _
  $region35: #{tpu_custom_call.1} parent=0 // pred_check_branch
    %379 = sbr.rel (0) target = $region37
  $region36: #{tpu_custom_call.1} parent=0 // pred_region
    _
  $region37: #{tpu_custom_call.1} parent=0 // pred_fallthru
    _

</llo_original>
